<compile_context>
chip_gen: v6e
topology: v6e:2x2x1
jax: 0.10.0
libtpu: 0.0.40
codegen_flags: <defaults>
</compile_context>

<pallas_src>
import functools

import jax
import jax.numpy as jnp
from jax.experimental import pallas as pl
from jax.experimental.pallas import tpu as pltpu

Z_DIM = 64 * 4        # 256, as in the reference script
HIDDEN = 255          # as in the module
HIDDEN_PAD = 256      # padded hidden dim used inside the kernel (lane-aligned)
IMG_DIM = 784         # 28*28 MNIST image (the img_dim this GAN uses)
LEAKY_SLOPE = 0.01    # nn.LeakyReLU() default negative_slope


def _round_up(n, m):
    return ((n + m - 1) // m) * m


def _pick_block_b(batch, max_block=512):
    """Adaptive batch tile: multiple of 16 (bf16 sublane pack), at least two
    grid steps when batch > 16 (dual-TC chips), capped at max_block."""
    b16 = _round_up(max(batch, 1), 16)
    if b16 <= 16:
        return 16
    return min(max_block, _round_up((b16 + 1) // 2, 16))


def generator_kernel(x_ref, w1_ref, b1_ref, w2_ref, b2_ref, o_ref):
    # Layer 1: Linear(z_dim -> hidden) + LeakyReLU.  bf16 MXU inputs, f32 acc.
    x = x_ref[...].astype(jnp.bfloat16)
    h = jnp.dot(x, w1_ref[...], preferred_element_type=jnp.float32)
    h = h + b1_ref[...]
    h = jnp.where(h >= 0, h, LEAKY_SLOPE * h)
    # Layer 2: Linear(hidden -> img_dim) + Tanh.  Cast h to bf16 only for the
    # MXU; bias add and tanh stay in f32 (EUP), final store in o_ref.dtype.
    y = jnp.dot(h.astype(jnp.bfloat16), w2_ref[...],
                preferred_element_type=jnp.float32)
    y = y + b2_ref[...]
    o_ref[...] = jnp.tanh(y).astype(o_ref.dtype)


@functools.partial(jax.jit, static_argnames=("block_b", "out_dtype"))
def _generator_forward_padded(x, w1, b1, w2, b2, *, block_b, out_dtype):
    """x: (B_pad, Z_DIM) f32 (B_pad multiple of block_b);
    w1: (Z_DIM, HIDDEN_PAD) bf16; b1: (1, HIDDEN_PAD) f32;
    w2: (HIDDEN_PAD, IMG_DIM) bf16; b2: (1, IMG_DIM) f32.
    Returns (B_pad, IMG_DIM) in out_dtype."""
    B, Z = x.shape
    H = w1.shape[1]
    D = w2.shape[1]
    grid = (B // block_b,)
    out_itemsize = jnp.dtype(out_dtype).itemsize
    cost = pl.CostEstimate(
        flops=2 * B * (Z * H + H * D),
        transcendentals=B * D,
        bytes_accessed=(x.size * x.dtype.itemsize
                        + w1.size * w1.dtype.itemsize
                        + b1.size * b1.dtype.itemsize
                        + w2.size * w2.dtype.itemsize
                        + b2.size * b2.dtype.itemsize
                        + B * D * out_itemsize),
    )
    return pl.pallas_call(
        generator_kernel,
        out_shape=jax.ShapeDtypeStruct((B, D), out_dtype),
        grid_spec=pltpu.PrefetchScalarGridSpec(
            num_scalar_prefetch=0,
            grid=grid,
            in_specs=[
                pl.BlockSpec((block_b, Z), lambda i: (i, 0)),
                pl.BlockSpec((Z, H), lambda i: (0, 0)),
                pl.BlockSpec((1, H), lambda i: (0, 0)),
                pl.BlockSpec((H, D), lambda i: (0, 0)),
                pl.BlockSpec((1, D), lambda i: (0, 0)),
            ],
            out_specs=pl.BlockSpec((block_b, D), lambda i: (i, 0)),
        ),
        compiler_params=pltpu.CompilerParams(
            dimension_semantics=("parallel",)),
        cost_estimate=cost,
    )(x, w1, b1, w2, b2)


def generator_forward(x, w1p, b1p, w2p, b2p, *, max_block_b=512,
                      out_dtype=jnp.bfloat16):
    """Batch-robust wrapper: adaptive batch tiling, minimal padding, output
    written at true width (IMG_DIM) with no extra HBM pass."""
    B = x.shape[0]
    block_b = _pick_block_b(B, max_block_b)
    B_pad = _round_up(B, block_b)
    x_in = x if B_pad == B else jnp.pad(x, ((0, B_pad - B), (0, 0)))
    out = _generator_forward_padded(x_in, w1p, b1p, w2p, b2p,
                                    block_b=block_b, out_dtype=out_dtype)
    return out if B_pad == B else out[:B]


def init_params(key):
    """Deterministic init mimicking PyTorch nn.Linear default:
    U(-1/sqrt(fan_in), 1/sqrt(fan_in)) for both weight and bias."""
    k1, k2, k3, k4 = jax.random.split(key, 4)
    bound1 = 1.0 / jnp.sqrt(Z_DIM)
    w1 = jax.random.uniform(k1, (Z_DIM, HIDDEN), jnp.float32, -bound1, bound1)
    b1 = jax.random.uniform(k2, (HIDDEN,), jnp.float32, -bound1, bound1)
    bound2 = 1.0 / jnp.sqrt(HIDDEN)
    w2 = jax.random.uniform(k3, (HIDDEN, IMG_DIM), jnp.float32, -bound2, bound2)
    b2 = jax.random.uniform(k4, (IMG_DIM,), jnp.float32, -bound2, bound2)
    return w1, b1, w2, b2


def pad_params(w1, b1, w2, b2):
    """Zero-pad only the hidden dim 255->256 (mathematically inert).  The
    output dim stays 784.  Weights go to bf16 (MXU inputs); biases stay f32
    (added to the f32 accumulator)."""
    w1p = jnp.pad(w1, ((0, 0), (0, HIDDEN_PAD - HIDDEN))).astype(jnp.bfloat16)
    b1p = jnp.pad(b1, ((0, HIDDEN_PAD - HIDDEN),)).reshape(1, HIDDEN_PAD)
    w2p = jnp.pad(w2, ((0, HIDDEN_PAD - HIDDEN), (0, 0))).astype(jnp.bfloat16)
    b2p = b2.reshape(1, IMG_DIM)
    return w1p, b1p, w2p, b2p


def reference_forward(x, w1, b1, w2, b2):
    h = x @ w1 + b1
    h = jnp.where(h >= 0, h, LEAKY_SLOPE * h)
    return jnp.tanh(h @ w2 + b2)


if __name__ == "__main__":
    key = jax.random.PRNGKey(0)
    kx, kp = jax.random.split(key)

    B = 64
    x = jax.random.normal(kx, (B, Z_DIM), jnp.float32)

    w1, b1, w2, b2 = init_params(kp)
    w1p, b1p, w2p, b2p = pad_params(w1, b1, w2, b2)

    out = generator_forward(x, w1p, b1p, w2p, b2p)   # bf16, 2 grid steps of 32
    out = jax.block_until_ready(out)

    ref = reference_forward(x, w1, b1, w2, b2)
    assert out.shape == (B, IMG_DIM), out.shape
    assert out.dtype == jnp.bfloat16, out.dtype
    # bf16 matmul inputs + bf16 output store -> loosened tolerance vs the f32
    # PyTorch reference (deliberate precision choice; tanh output in [-1,1]).
    max_err = float(jnp.max(jnp.abs(out.astype(jnp.float32) - ref)))
    assert max_err < 5e-2, max_err

    print("KERNEL_OK")
</pallas_src>

<mosaic_0001>
module attributes {stable_mosaic.version = 11 : i64} {
  func.func @generator_kernel(%arg0: i32, %arg1: memref<32x256xf32, #tpu.memory_space<vmem>>, %arg2: memref<256x256xbf16, #tpu.memory_space<vmem>>, %arg3: memref<1x256xf32, #tpu.memory_space<vmem>>, %arg4: memref<256x784xbf16, #tpu.memory_space<vmem>>, %arg5: memref<1x784xf32, #tpu.memory_space<vmem>>, %arg6: memref<32x784xbf16, #tpu.memory_space<vmem>>) attributes {dimension_semantics = [#tpu.dimension_semantics<parallel>], iteration_bounds = array<i64: 2>, scalar_prefetch = 0 : i64, scratch_operands = 0 : i64, tpu.core_type = #tpu.core_type<tc>, window_params = [{transform_indices = @transform_0, window_bounds = array<i64: 32, 256>}, {pipeline_mode = #tpu.pipeline_mode<synchronous>, transform_indices = @transform_1, window_bounds = array<i64: 256, 256>}, {pipeline_mode = #tpu.pipeline_mode<synchronous>, transform_indices = @transform_2, window_bounds = array<i64: 1, 256>}, {pipeline_mode = #tpu.pipeline_mode<synchronous>, transform_indices = @transform_3, window_bounds = array<i64: 256, 784>}, {pipeline_mode = #tpu.pipeline_mode<synchronous>, transform_indices = @transform_4, window_bounds = array<i64: 1, 784>}, {transform_indices = @transform_5, window_bounds = array<i64: 32, 784>}]} {
    %c0 = arith.constant 0 : index
    %c0_0 = arith.constant 0 : index
    %0 = vector.load %arg1[%c0, %c0_0] : memref<32x256xf32, #tpu.memory_space<vmem>>, vector<32x256xf32>
    %1 = arith.truncf %0 : vector<32x256xf32> to vector<32x256xbf16>
    %c0_1 = arith.constant 0 : index
    %c0_2 = arith.constant 0 : index
    %2 = vector.load %arg2[%c0_1, %c0_2] : memref<256x256xbf16, #tpu.memory_space<vmem>>, vector<256x256xbf16>
    %cst = arith.constant dense<0.000000e+00> : vector<32x256xf32>
    %3 = tpu.matmul %1, %2, %cst {dimension_numbers = #tpu.dot_dimension_numbers<[1], [0], [0], [1], [0, 0, 1, 1], [], []>} : vector<32x256xbf16>, vector<256x256xbf16>, vector<32x256xf32> -> vector<32x256xf32>
    %c0_3 = arith.constant 0 : index
    %c0_4 = arith.constant 0 : index
    %4 = vector.load %arg3[%c0_3, %c0_4] : memref<1x256xf32, #tpu.memory_space<vmem>>, vector<1x256xf32>
    %5 = vector.broadcast %4 : vector<1x256xf32> to vector<32x256xf32>
    %6 = arith.addf %3, %5 : vector<32x256xf32>
    %cst_5 = arith.constant 0.000000e+00 : f32
    %7 = vector.broadcast %cst_5 : f32 to vector<32x256xf32>
    %8 = arith.cmpf oge, %6, %7 : vector<32x256xf32>
    %cst_6 = arith.constant 0.00999999977 : f32
    %9 = vector.broadcast %cst_6 : f32 to vector<32x256xf32>
    %10 = arith.mulf %9, %6 : vector<32x256xf32>
    %11 = arith.select %8, %6, %10 : vector<32x256xi1>, vector<32x256xf32>
    %12 = arith.truncf %11 : vector<32x256xf32> to vector<32x256xbf16>
    %c0_7 = arith.constant 0 : index
    %c0_8 = arith.constant 0 : index
    %13 = vector.load %arg4[%c0_7, %c0_8] : memref<256x784xbf16, #tpu.memory_space<vmem>>, vector<256x784xbf16>
    %cst_9 = arith.constant dense<0.000000e+00> : vector<32x784xf32>
    %14 = tpu.matmul %12, %13, %cst_9 {dimension_numbers = #tpu.dot_dimension_numbers<[1], [0], [0], [1], [0, 0, 1, 1], [], []>} : vector<32x256xbf16>, vector<256x784xbf16>, vector<32x784xf32> -> vector<32x784xf32>
    %c0_10 = arith.constant 0 : index
    %c0_11 = arith.constant 0 : index
    %15 = vector.load %arg5[%c0_10, %c0_11] : memref<1x784xf32, #tpu.memory_space<vmem>>, vector<1x784xf32>
    %16 = vector.broadcast %15 : vector<1x784xf32> to vector<32x784xf32>
    %17 = arith.addf %14, %16 : vector<32x784xf32>
    %18 = math.tanh %17 : vector<32x784xf32>
    %19 = arith.truncf %18 : vector<32x784xf32> to vector<32x784xbf16>
    %c0_12 = arith.constant 0 : index
    %c0_13 = arith.constant 0 : index
    %20 = vector.load %arg6[%c0_12, %c0_13] : memref<32x784xbf16, #tpu.memory_space<vmem>>, vector<32x784xbf16>
    tpu.vector_store %arg6[%c0_12, %c0_13], %19 {strides = array<i32>} : memref<32x784xbf16, #tpu.memory_space<vmem>>, vector<32x784xbf16>,
    return
  }
  func.func @transform_0(%arg0: i32) -> (i32, i32) {
    %c0_i32 = arith.constant 0 : i32
    %c0_i32_0 = arith.constant 0 : i32
    return %arg0, %c0_i32 : i32, i32
  }
  func.func @transform_1(%arg0: i32) -> (i32, i32) {
    %c0_i32 = arith.constant 0 : i32
    %c0_i32_0 = arith.constant 0 : i32
    %c0_i32_1 = arith.constant 0 : i32
    return %c0_i32, %c0_i32_0 : i32, i32
  }
  func.func @transform_2(%arg0: i32) -> (i32, i32) {
    %c0_i32 = arith.constant 0 : i32
    %c0_i32_0 = arith.constant 0 : i32
    %c0_i32_1 = arith.constant 0 : i32
    return %c0_i32, %c0_i32_0 : i32, i32
  }
  func.func @transform_3(%arg0: i32) -> (i32, i32) {
    %c0_i32 = arith.constant 0 : i32
    %c0_i32_0 = arith.constant 0 : i32
    %c0_i32_1 = arith.constant 0 : i32
    return %c0_i32, %c0_i32_0 : i32, i32
  }
  func.func @transform_4(%arg0: i32) -> (i32, i32) {
    %c0_i32 = arith.constant 0 : i32
    %c0_i32_0 = arith.constant 0 : i32
    %c0_i32_1 = arith.constant 0 : i32
    return %c0_i32, %c0_i32_0 : i32, i32
  }
  func.func @transform_5(%arg0: i32) -> (i32, i32) {
    %c0_i32 = arith.constant 0 : i32
    %c0_i32_0 = arith.constant 0 : i32
    return %arg0, %c0_i32 : i32, i32
  }
}

</mosaic_0001>

<llo_original>
// kernel: _generator_forward_padded.1
$region0: #{_generator_forward_padded.1}
  #allocation0 [shape = 'u32[]', space=smem, size = 0x4, offset = 0x4, fixed_abs, tag = 'smem constant byte address 0x4 - core index']
  #allocation1 [shape = 'u32[144,128]{1,0:T(1,128)}', space=vmem, size = 0x12000, scoped, tag = 'internal scratch']
  %s0 = inlined_call_operand.vmem [shape: f32[64,256], index: 0, kind: input, shape index: {}]
  %s1 = inlined_call_operand.vmem [shape: bf16[256,256], index: 1, kind: input, shape index: {}]
  %s2 = inlined_call_operand.vmem [shape: f32[1,256], index: 2, kind: input, shape index: {}]
  %s3 = inlined_call_operand.vmem [shape: bf16[256,784], index: 3, kind: input, shape index: {}]
  %s4 = inlined_call_operand.vmem [shape: f32[1,784], index: 4, kind: input, shape index: {}]
  %s5 = inlined_call_operand.hbm [shape: bf16[64,784], index: 5, kind: output, shape index: {}]
  %s6 = sld [smem:[#allocation0]]
  $region53: #{_generator_forward_padded.1} parent=0
    _
  %s8 = ssub.s32 1, %s6
  %s9 = scalar_select 0, %s8, %s6
  $region1: #{_generator_forward_padded.1} parent=0
    #allocation2 [shape = 'u8[114688]{0}', space=vmem, size = 0x1c000, scoped, tag = 'output window, operand 0']
    #allocation3 [shape = 's32[2]{0}', space=sflag, size = 0x8, scoped, tag = 'scoped memory for _generator_forward_padded.1']
    %10 = vsyncpa [#allocation3], 0
    %s11 = scalar_lea.sflag [#allocation3], 1
    %12 = vsyncpa %s11, 0
    loop: start=0, step=1, limit=4
    $region2: #{_generator_forward_padded.1} parent=1 // loop_pre_header
      _
    $region3: #{_generator_forward_padded.1} parent=1 // loop_header
      %s14 = sphi 0, %s18
      %p15 = scmp.ge.s32.totalorder %s14, 4
      %s24 = sphi 0, %s26
      %s27 = sphi 0, %s24
      %s28 = sphi 0, %s27
      %s44 = sphi 0, %s28
      %s48 = sphi 0, %s48
      %s50 = sphi 0, %s48
      %s51 = sphi 0, %s50
      %s65 = sphi 0, %s51
      %s69 = sphi 0, %s69
      %s71 = sphi 0, %s69
      %s72 = sphi 0, %s71
      %s86 = sphi 0, %s72
      %s90 = sphi 0, %s90
      %s92 = sphi 0, %s90
      %s93 = sphi 0, %s92
      %s107 = sphi 0, %s93
      %s111 = sphi 0, %s111
      %s113 = sphi 0, %s111
      %s114 = sphi 0, %s113
      %s128 = sphi 0, %s114
      %s134 = sphi 0, %s136
      %s137 = sphi 0, %s134
      %s138 = sphi 0, %s137
      %s154 = sphi 0, %s138
    $region4: #{_generator_forward_padded.1} parent=1 // loop_header_branch
      %17 = sbr.rel (%p15) target = $region8
    $region5: #{_generator_forward_padded.1} parent=1 // loop_body
      %s19 = ssub.s32 %s14, 1
      %s20 = ssub.s32 %s14, 2
      %s21 = sadd.s32 %s14, 1
      %s22 = ssub.s32 %s14, %s21
      %p23 = scmp.eq.s32.totalorder %s22, 0
      %s25 = sadd.s32 %s24, 1
      %s26 = scalar_select %p23, %s24, %s25
      %p29 = pneg %p23
      %p30 = scmp.eq.s32.totalorder %s14, 1
      %p31 = por %p29, %p30
      %p32 = scmp.ne.s32.totalorder %s24, %s27
      %p33 = scmp.eq.s32.totalorder %s14, 0
      %p34 = por %p32, %p33
      %p35 = scmp.ne.s32.totalorder %s24, %s27
      %p36 = scmp.eq.s32.totalorder %s19, 1
      %p37 = por %p35, %p36
      %p38 = scmp.ne.s32.totalorder %s27, %s28
      %p39 = scmp.eq.s32.totalorder %s19, 0
      %p40 = por %p38, %p39
      %p41 = scmp.ne.s32.totalorder %s27, %s28
      %p42 = scmp.eq.s32.totalorder %s20, 1
      %p43 = por %p41, %p42
      %p45 = scmp.ne.s32.totalorder %s28, %s44
      %p46 = scmp.eq.s32.totalorder %s20, 0
      %p47 = por %p45, %p46
      %s49 = sadd.s32 %s48, 1
      %p52 = scmp.eq.s32.totalorder %s14, 1
      %p53 = scmp.ne.s32.totalorder %s48, %s50
      %p54 = scmp.eq.s32.totalorder %s14, 0
      %p55 = por %p53, %p54
      %p56 = scmp.ne.s32.totalorder %s48, %s50
      %p57 = scmp.eq.s32.totalorder %s19, 1
      %p58 = por %p56, %p57
      %p59 = scmp.ne.s32.totalorder %s50, %s51
      %p60 = scmp.eq.s32.totalorder %s19, 0
      %p61 = por %p59, %p60
      %p62 = scmp.ne.s32.totalorder %s50, %s51
      %p63 = scmp.eq.s32.totalorder %s20, 1
      %p64 = por %p62, %p63
      %p66 = scmp.ne.s32.totalorder %s51, %s65
      %p67 = scmp.eq.s32.totalorder %s20, 0
      %p68 = por %p66, %p67
      %s70 = sadd.s32 %s69, 1
      %p73 = scmp.eq.s32.totalorder %s14, 1
      %p74 = scmp.ne.s32.totalorder %s69, %s71
      %p75 = scmp.eq.s32.totalorder %s14, 0
      %p76 = por %p74, %p75
      %p77 = scmp.ne.s32.totalorder %s69, %s71
      %p78 = scmp.eq.s32.totalorder %s19, 1
      %p79 = por %p77, %p78
      %p80 = scmp.ne.s32.totalorder %s71, %s72
      %p81 = scmp.eq.s32.totalorder %s19, 0
      %p82 = por %p80, %p81
      %p83 = scmp.ne.s32.totalorder %s71, %s72
      %p84 = scmp.eq.s32.totalorder %s20, 1
      %p85 = por %p83, %p84
      %p87 = scmp.ne.s32.totalorder %s72, %s86
      %p88 = scmp.eq.s32.totalorder %s20, 0
      %p89 = por %p87, %p88
      %s91 = sadd.s32 %s90, 1
      %p94 = scmp.eq.s32.totalorder %s14, 1
      %p95 = scmp.ne.s32.totalorder %s90, %s92
      %p96 = scmp.eq.s32.totalorder %s14, 0
      %p97 = por %p95, %p96
      %p98 = scmp.ne.s32.totalorder %s90, %s92
      %p99 = scmp.eq.s32.totalorder %s19, 1
      %p100 = por %p98, %p99
      %p101 = scmp.ne.s32.totalorder %s92, %s93
      %p102 = scmp.eq.s32.totalorder %s19, 0
      %p103 = por %p101, %p102
      %p104 = scmp.ne.s32.totalorder %s92, %s93
      %p105 = scmp.eq.s32.totalorder %s20, 1
      %p106 = por %p104, %p105
      %p108 = scmp.ne.s32.totalorder %s93, %s107
      %p109 = scmp.eq.s32.totalorder %s20, 0
      %p110 = por %p108, %p109
      %s112 = sadd.s32 %s111, 1
      %p115 = scmp.eq.s32.totalorder %s14, 1
      %p116 = scmp.ne.s32.totalorder %s111, %s113
      %p117 = scmp.eq.s32.totalorder %s14, 0
      %p118 = por %p116, %p117
      %p119 = scmp.ne.s32.totalorder %s111, %s113
      %p120 = scmp.eq.s32.totalorder %s19, 1
      %p121 = por %p119, %p120
      %p122 = scmp.ne.s32.totalorder %s113, %s114
      %p123 = scmp.eq.s32.totalorder %s19, 0
      %p124 = por %p122, %p123
      %p125 = scmp.ne.s32.totalorder %s113, %s114
      %p126 = scmp.eq.s32.totalorder %s20, 1
      %p127 = por %p125, %p126
      %p129 = scmp.ne.s32.totalorder %s114, %s128
      %p130 = scmp.eq.s32.totalorder %s20, 0
      %p131 = por %p129, %p130
      %s132 = ssub.s32 %s14, %s21
      %p133 = scmp.eq.s32.totalorder %s132, 0
      %s135 = sadd.s32 %s134, 1
      %s136 = scalar_select %p133, %s134, %s135
      %p139 = pneg %p133
      %p140 = scmp.eq.s32.totalorder %s14, 1
      %p141 = por %p139, %p140
      %p142 = scmp.ne.s32.totalorder %s134, %s137
      %p143 = scmp.eq.s32.totalorder %s14, 0
      %p144 = por %p142, %p143
      %p145 = scmp.ne.s32.totalorder %s134, %s137
      %p146 = scmp.eq.s32.totalorder %s19, 1
      %p147 = por %p145, %p146
      %p148 = scmp.ne.s32.totalorder %s137, %s138
      %p149 = scmp.eq.s32.totalorder %s19, 0
      %p150 = por %p148, %p149
      %p151 = scmp.ne.s32.totalorder %s137, %s138
      %p152 = scmp.eq.s32.totalorder %s20, 1
      %p153 = por %p151, %p152
      %p155 = scmp.ne.s32.totalorder %s138, %s154
      %p156 = scmp.eq.s32.totalorder %s20, 0
      %p157 = por %p155, %p156
      %p158 = scmp.le.s32.totalorder 1, %s14
      %p159 = scmp.lt.s32.totalorder %s14, 3
      %p160 = pnand %p158, %p159
      %p161 = pneg %p160
      // Predicated region
      $region9: #{_generator_forward_padded.1} parent=5 // pred_check
        _
      $region10: #{_generator_forward_padded.1} parent=5 // pred_check_branch
        %163 = sbr.rel (%p160) target = $region12
      $region11: #{_generator_forward_padded.1} parent=5 // pred_region
        %s164 = ssub.s32 %s14, 1
        // Predicated region
        $region13: #{_generator_forward_padded.1} parent=11 // pred_check
          %p165 = pneg %p61
        $region14: #{_generator_forward_padded.1} parent=11 // pred_check_branch
          %167 = sbr.rel (%p165) target = $region16
        $region15: #{_generator_forward_padded.1} parent=11 // pred_region
          _
        $region16: #{_generator_forward_padded.1} parent=11 // pred_fallthru
          _
        // Predicated region
        $region17: #{_generator_forward_padded.1} parent=11 // pred_check
          %p168 = pneg %p82
        $region18: #{_generator_forward_padded.1} parent=11 // pred_check_branch
          %170 = sbr.rel (%p168) target = $region20
        $region19: #{_generator_forward_padded.1} parent=11 // pred_region
          _
        $region20: #{_generator_forward_padded.1} parent=11 // pred_fallthru
          _
        // Predicated region
        $region21: #{_generator_forward_padded.1} parent=11 // pred_check
          %p171 = pneg %p103
        $region22: #{_generator_forward_padded.1} parent=11 // pred_check_branch
          %173 = sbr.rel (%p171) target = $region24
        $region23: #{_generator_forward_padded.1} parent=11 // pred_region
          _
        $region24: #{_generator_forward_padded.1} parent=11 // pred_fallthru
          _
        // Predicated region
        $region25: #{_generator_forward_padded.1} parent=11 // pred_check
          %p174 = pneg %p124
        $region26: #{_generator_forward_padded.1} parent=11 // pred_check_branch
          %176 = sbr.rel (%p174) target = $region28
        $region27: #{_generator_forward_padded.1} parent=11 // pred_region
          _
        $region28: #{_generator_forward_padded.1} parent=11 // pred_fallthru
          _
      $region12: #{_generator_forward_padded.1} parent=5 // pred_fallthru
        _
      %p177 = scmp.lt.s32.totalorder %s14, 2
      // Predicated region
      $region29: #{_generator_forward_padded.1} parent=5 // pred_check
        %p178 = pneg %p177
      $region30: #{_generator_forward_padded.1} parent=5 // pred_check_branch
        %180 = sbr.rel (%p178) target = $region32
      $region31: #{_generator_forward_padded.1} parent=5 // pred_region
        // Predicated region
        $region33: #{_generator_forward_padded.1} parent=31 // pred_check
          %p181 = pneg %p34
        $region34: #{_generator_forward_padded.1} parent=31 // pred_check_branch
          %183 = sbr.rel (%p181) target = $region36
        $region35: #{_generator_forward_padded.1} parent=31 // pred_region
          %s184 = smul.u32 4, %s14
          %p185 = scmp.lt.s32.totalorder %s184, 7
          %s186 = scalar_select %p185, %s184, 7
          %s187 = smul.addr %s186, 2
          %s188 = smul.addr %s187, 8
          %s189 = scalar_lea.vmem %s0, %s188
          %s190 = smul.u32 4, %s14
        $region36: #{_generator_forward_padded.1} parent=31 // pred_fallthru
          _
      $region32: #{_generator_forward_padded.1} parent=5 // pred_fallthru
        _
      %p191 = scmp.le.s32.totalorder 1, %s14
      %p192 = scmp.lt.s32.totalorder %s14, 3
      %p193 = pnand %p191, %p192
      %p194 = pneg %p193
      // Predicated region
      $region37: #{_generator_forward_padded.1} parent=5 // pred_check
        _
      $region38: #{_generator_forward_padded.1} parent=5 // pred_check_branch
        %196 = sbr.rel (%p193) target = $region40
      $region39: #{_generator_forward_padded.1} parent=5 // pred_region
        %s197 = ssub.s32 %s14, 1
        %s198 = smul.u32 4, %s19
        %p199 = scmp.lt.s32.totalorder %s198, 7
        %s200 = scalar_select %p199, %s198, 7
        %s201 = smul.addr %s200, 2
        %s202 = smul.addr %s201, 8
        %s203 = scalar_lea.vmem %s0, %s202
        %p204 = pneg %p40
        %p205 = pneg %p37
        %p206 = pneg %p61
        %p207 = pneg %p58
        %p208 = pneg %p82
        %p209 = pneg %p79
        %p210 = pneg %p103
        %p211 = pneg %p100
        %p212 = pneg %p124
        %p213 = pneg %p121
        %p214 = pneg %p150
        %p215 = pneg %p147
        %s216 = sand.u32 %s137, 1
        %s217 = scalar_lea.sflag [#allocation3], %s216
        %s218 = sand.u32 %s137, 1
        %s219 = smul.addr %s218, 112
        %s220 = scalar_lea.vmem [#allocation2], %s219
        %s221 = smul.u32 4, %s19
        %p222 = scmp.lt.s32.totalorder %s221, 7
        %s223 = scalar_select %p222, %s221, 7
        %s224 = smul.addr %s223, 2
        %s225 = smul.addr %s224, 8
        %s226 = scalar_lea.vmem %s0, %s225
        %s227 = smul.u32 4, %s19
        %s228 = smul.u32 4, %s19
        %v230 = vld [vmem:[%s226] sm:$0xff]
        %v231 = vld [vmem:[%s226 + $0x8] sm:$0xff]
        %v232 = vld [vmem:[%s226 + $0x10] sm:$0xff]
        %v233 = vld [vmem:[%s226 + $0x18] sm:$0xff]
        %v234 = vld [vmem:[%s226 + $0x20] sm:$0xff]
        %v235 = vld [vmem:[%s226 + $0x28] sm:$0xff]
        %v236 = vld [vmem:[%s226 + $0x30] sm:$0xff]
        %v237 = vld [vmem:[%s226 + $0x38] sm:$0xff]
        %v238 = vpack.c.bf16 %v232, %v230
        %v239 = vpack.c.bf16 %v233, %v231
        %v240 = vpack.c.bf16 %v236, %v234
        %v241 = vpack.c.bf16 %v237, %v235
        %v242 = vld [vmem:[%s1] sm:$0xff]
        %v243 = vld [vmem:[%s1 + $0x8] sm:$0xff]
        %v244 = vld [vmem:[%s1 + $0x10] sm:$0xff]
        %v245 = vld [vmem:[%s1 + $0x18] sm:$0xff]
        %v246 = vld [vmem:[%s1 + $0x20] sm:$0xff]
        %v247 = vld [vmem:[%s1 + $0x28] sm:$0xff]
        %v248 = vld [vmem:[%s1 + $0x30] sm:$0xff]
        %v249 = vld [vmem:[%s1 + $0x38] sm:$0xff]
        %v250 = vld [vmem:[%s1 + $0x40] sm:$0xff]
        %v251 = vld [vmem:[%s1 + $0x48] sm:$0xff]
        %v252 = vld [vmem:[%s1 + $0x50] sm:$0xff]
        %v253 = vld [vmem:[%s1 + $0x58] sm:$0xff]
        %v254 = vld [vmem:[%s1 + $0x60] sm:$0xff]
        %v255 = vld [vmem:[%s1 + $0x68] sm:$0xff]
        %v256 = vld [vmem:[%s1 + $0x70] sm:$0xff]
        %v257 = vld [vmem:[%s1 + $0x78] sm:$0xff]
        %v258 = vld [vmem:[%s1 + $0x80] sm:$0xff]
        %v259 = vld [vmem:[%s1 + $0x88] sm:$0xff]
        %v260 = vld [vmem:[%s1 + $0x90] sm:$0xff]
        %v261 = vld [vmem:[%s1 + $0x98] sm:$0xff]
        %v262 = vld [vmem:[%s1 + $0xa0] sm:$0xff]
        %v263 = vld [vmem:[%s1 + $0xa8] sm:$0xff]
        %v264 = vld [vmem:[%s1 + $0xb0] sm:$0xff]
        %v265 = vld [vmem:[%s1 + $0xb8] sm:$0xff]
        %v266 = vld [vmem:[%s1 + $0xc0] sm:$0xff]
        %v267 = vld [vmem:[%s1 + $0xc8] sm:$0xff]
        %v268 = vld [vmem:[%s1 + $0xd0] sm:$0xff]
        %v269 = vld [vmem:[%s1 + $0xd8] sm:$0xff]
        %v270 = vld [vmem:[%s1 + $0xe0] sm:$0xff]
        %v271 = vld [vmem:[%s1 + $0xe8] sm:$0xff]
        %v272 = vld [vmem:[%s1 + $0xf0] sm:$0xff]
        %v273 = vld [vmem:[%s1 + $0xf8] sm:$0xff]
        %v274 = vld [vmem:[%s2] sm:$0x3]
        %v276 = vlaneseq
        %v277 = vshrl.u32 %v276, 7
        %v278 = vsub.s32 0, %v277
        %v279 = vrot.slane %v274, %v278
        %v280 = vlaneseq
        %v281 = vshrl.u32 %v280, 7
        %v282 = vsub.s32 1, %v281
        %v283 = vrot.slane %v274, %v282
        %v318 = vunpack.c.l.b16 %v242
        %v319 = vunpack.c.h.b16 %v242
        %v320 = vunpack.c.l.b16 %v243
        %v321 = vunpack.c.h.b16 %v243
        %v322 = vunpack.c.l.b16 %v244
        %v323 = vunpack.c.h.b16 %v244
        %v324 = vunpack.c.l.b16 %v245
        %v325 = vunpack.c.h.b16 %v245
        %v326 = vunpack.c.l.b16 %v246
        %v327 = vunpack.c.h.b16 %v246
        %v328 = vunpack.c.l.b16 %v247
        %v329 = vunpack.c.h.b16 %v247
        %v330 = vunpack.c.l.b16 %v248
        %v331 = vunpack.c.h.b16 %v248
        %v332 = vunpack.c.l.b16 %v249
        %v333 = vunpack.c.h.b16 %v249
        %v334 = vunpack.c.l.b16 %v250
        %v335 = vunpack.c.h.b16 %v250
        %v336 = vunpack.c.l.b16 %v251
        %v337 = vunpack.c.h.b16 %v251
        %v338 = vunpack.c.l.b16 %v252
        %v339 = vunpack.c.h.b16 %v252
        %v340 = vunpack.c.l.b16 %v253
        %v341 = vunpack.c.h.b16 %v253
        %v342 = vunpack.c.l.b16 %v254
        %v343 = vunpack.c.h.b16 %v254
        %v344 = vunpack.c.l.b16 %v255
        %v345 = vunpack.c.h.b16 %v255
        %v346 = vunpack.c.l.b16 %v256
        %v347 = vunpack.c.h.b16 %v256
        %v348 = vunpack.c.l.b16 %v257
        %v349 = vunpack.c.h.b16 %v257
        %v350 = vunpack.c.l.b16 %v258
        %v351 = vunpack.c.h.b16 %v258
        %v352 = vunpack.c.l.b16 %v259
        %v353 = vunpack.c.h.b16 %v259
        %v354 = vunpack.c.l.b16 %v260
        %v355 = vunpack.c.h.b16 %v260
        %v356 = vunpack.c.l.b16 %v261
        %v357 = vunpack.c.h.b16 %v261
        %v358 = vunpack.c.l.b16 %v262
        %v359 = vunpack.c.h.b16 %v262
        %v360 = vunpack.c.l.b16 %v263
        %v361 = vunpack.c.h.b16 %v263
        %v362 = vunpack.c.l.b16 %v264
        %v363 = vunpack.c.h.b16 %v264
        %v364 = vunpack.c.l.b16 %v265
        %v365 = vunpack.c.h.b16 %v265
        %v366 = vunpack.c.l.b16 %v266
        %v367 = vunpack.c.h.b16 %v266
        %v368 = vunpack.c.l.b16 %v267
        %v369 = vunpack.c.h.b16 %v267
        %v370 = vunpack.c.l.b16 %v268
        %v371 = vunpack.c.h.b16 %v268
        %v372 = vunpack.c.l.b16 %v269
        %v373 = vunpack.c.h.b16 %v269
        %v374 = vunpack.c.l.b16 %v270
        %v375 = vunpack.c.h.b16 %v270
        %v376 = vunpack.c.l.b16 %v271
        %v377 = vunpack.c.h.b16 %v271
        %v378 = vunpack.c.l.b16 %v272
        %v379 = vunpack.c.h.b16 %v272
        %v380 = vunpack.c.l.b16 %v273
        %v381 = vunpack.c.h.b16 %v273
        %v382 = vpack.c.b16 %v320, %v318
        %v383 = vpack.c.b16 %v321, %v319
        %v384 = vpack.c.b16 %v324, %v322
        %v385 = vpack.c.b16 %v325, %v323
        %v386 = vpack.c.b16 %v328, %v326
        %v387 = vpack.c.b16 %v329, %v327
        %v388 = vpack.c.b16 %v332, %v330
        %v389 = vpack.c.b16 %v333, %v331
        %v390 = vpack.c.b16 %v336, %v334
        %v391 = vpack.c.b16 %v337, %v335
        %v392 = vpack.c.b16 %v340, %v338
        %v393 = vpack.c.b16 %v341, %v339
        %v394 = vpack.c.b16 %v344, %v342
        %v395 = vpack.c.b16 %v345, %v343
        %v396 = vpack.c.b16 %v348, %v346
        %v397 = vpack.c.b16 %v349, %v347
        %v398 = vpack.c.b16 %v352, %v350
        %v399 = vpack.c.b16 %v353, %v351
        %v400 = vpack.c.b16 %v356, %v354
        %v401 = vpack.c.b16 %v357, %v355
        %v402 = vpack.c.b16 %v360, %v358
        %v403 = vpack.c.b16 %v361, %v359
        %v404 = vpack.c.b16 %v364, %v362
        %v405 = vpack.c.b16 %v365, %v363
        %v406 = vpack.c.b16 %v368, %v366
        %v407 = vpack.c.b16 %v369, %v367
        %v408 = vpack.c.b16 %v372, %v370
        %v409 = vpack.c.b16 %v373, %v371
        %v410 = vpack.c.b16 %v376, %v374
        %v411 = vpack.c.b16 %v377, %v375
        %v412 = vpack.c.b16 %v380, %v378
        %v413 = vpack.c.b16 %v381, %v379
        %446 = vmatprep.subr.bf16.mxu0 %v397
        %447 = vmatpush1.bf16.msra.mxu0 %v396
        %448 = vmatprep.subr.bf16.mxu0 %v395
        %449 = vmatpush1.bf16.msra.mxu0 %v394
        %450 = vmatprep.subr.bf16.mxu0 %v393
        %451 = vmatpush1.bf16.msra.mxu0 %v392
        %452 = vmatprep.subr.bf16.mxu0 %v391
        %453 = vmatpush1.bf16.msra.mxu0 %v390
        %454 = vmatprep.subr.bf16.mxu0 %v389
        %455 = vmatpush1.bf16.msra.mxu0 %v388
        %456 = vmatprep.subr.bf16.mxu0 %v387
        %457 = vmatpush1.bf16.msra.mxu0 %v386
        %458 = vmatprep.subr.bf16.mxu0 %v385
        %459 = vmatpush1.bf16.msra.mxu0 %v384
        %460 = vmatprep.subr.bf16.mxu0 %v383
        %461 = vmatpush1.bf16.msra.mxu0 %v382
        %462 = vmatprep.subr.bf16.mxu0 %v413
        %463 = vmatpush2.bf16.msra.mxu0 %v412
        %464 = vmatprep.subr.bf16.mxu0 %v411
        %465 = vmatpush2.bf16.msra.mxu0 %v410
        %466 = vmatprep.subr.bf16.mxu0 %v409
        %467 = vmatpush2.bf16.msra.mxu0 %v408
        %468 = vmatprep.subr.bf16.mxu0 %v407
        %469 = vmatpush2.bf16.msra.mxu0 %v406
        %470 = vmatprep.subr.bf16.mxu0 %v405
        %471 = vmatpush2.bf16.msra.mxu0 %v404
        %472 = vmatprep.subr.bf16.mxu0 %v403
        %473 = vmatpush2.bf16.msra.mxu0 %v402
        %474 = vmatprep.subr.bf16.mxu0 %v401
        %475 = vmatpush2.bf16.msra.mxu0 %v400
        %476 = vmatprep.subr.bf16.mxu0 %v399
        %477 = vmatpush2.bf16.msra.mxu0 %v398
        %478 = vmatprep.mubr.bf16.mxu0 %v239
        %479 = vmatmul.mubr.bf16.gmra.mxu0 %v238
        %v480 = vpop.f32.mrf.mxu0
        %v481 = vadd.f32 %v279, %v480
        %v482 = vpop.f32.mrf.mxu0
        %v483 = vadd.f32 %v283, %v482
        %v484 = vpop.f32.mrf.mxu0
        %v485 = vadd.f32 %v279, %v484
        %v486 = vpop.f32.mrf.mxu0
        %v487 = vadd.f32 %v283, %v486
        %488 = vmatprep.mubr.bf16.mxu0 %v241
        %489 = vmatmul.mubr.bf16.gmra.mxu0 %v240
        %v490 = vpop.f32.mrf.mxu0
        %v491 = vadd.f32 %v279, %v490
        %v492 = vpop.f32.mrf.mxu0
        %v493 = vadd.f32 %v283, %v492
        %v494 = vpop.f32.mrf.mxu0
        %v495 = vadd.f32 %v279, %v494
        %v496 = vpop.f32.mrf.mxu0
        %v497 = vadd.f32 %v283, %v496
        %498 = vdwg.mxu0
        %vm499 = vcmp.ge.f32.partialorder %v481, 0.0
        %vm500 = vcmp.ge.f32.partialorder %v483, 0.0
        %vm501 = vcmp.ge.f32.partialorder %v485, 0.0
        %vm502 = vcmp.ge.f32.partialorder %v487, 0.0
        %vm503 = vcmp.ge.f32.partialorder %v491, 0.0
        %vm504 = vcmp.ge.f32.partialorder %v493, 0.0
        %vm505 = vcmp.ge.f32.partialorder %v495, 0.0
        %vm506 = vcmp.ge.f32.partialorder %v497, 0.0
        %v507 = vmul.f32 %v481, 0.01
        %v508 = vmul.f32 %v483, 0.01
        %v509 = vmul.f32 %v485, 0.01
        %v510 = vmul.f32 %v487, 0.01
        %v511 = vmul.f32 %v491, 0.01
        %v512 = vmul.f32 %v493, 0.01
        %v513 = vmul.f32 %v495, 0.01
        %v514 = vmul.f32 %v497, 0.01
        %v515 = vsel %vm499, %v481, %v507
        %v516 = vsel %vm500, %v483, %v508
        %v517 = vsel %vm501, %v485, %v509
        %v518 = vsel %vm502, %v487, %v510
        %v519 = vsel %vm503, %v491, %v511
        %v520 = vsel %vm504, %v493, %v512
        %v521 = vsel %vm505, %v495, %v513
        %v522 = vsel %vm506, %v497, %v514
        %v523 = vpack.c.bf16 %v517, %v515
        %v524 = vpack.c.bf16 %v518, %v516
        %v525 = vpack.c.bf16 %v521, %v519
        %v526 = vpack.c.bf16 %v522, %v520
        %v527 = vld [vmem:[%s3] sm:$0xff]
        %v528 = vld [vmem:[%s3 + $0x8] sm:$0xff]
        %v529 = vld [vmem:[%s3 + $0x10] sm:$0xff]
        %v530 = vld [vmem:[%s3 + $0x18] sm:$0xf]
        %v531 = vld [vmem:[%s3 + $0x1c] sm:$0xff]
        %v532 = vld [vmem:[%s3 + $0x24] sm:$0xff]
        %v533 = vld [vmem:[%s3 + $0x2c] sm:$0xff]
        %v534 = vld [vmem:[%s3 + $0x34] sm:$0xf]
        %v535 = vld [vmem:[%s3 + $0x38] sm:$0xff]
        %v536 = vld [vmem:[%s3 + $0x40] sm:$0xff]
        %v537 = vld [vmem:[%s3 + $0x48] sm:$0xff]
        %v538 = vld [vmem:[%s3 + $0x50] sm:$0xf]
        %v539 = vld [vmem:[%s3 + $0x54] sm:$0xff]
        %v540 = vld [vmem:[%s3 + $0x5c] sm:$0xff]
        %v541 = vld [vmem:[%s3 + $0x64] sm:$0xff]
        %v542 = vld [vmem:[%s3 + $0x6c] sm:$0xf]
        %v543 = vld [vmem:[%s3 + $0x70] sm:$0xff]
        %v544 = vld [vmem:[%s3 + $0x78] sm:$0xff]
        %v545 = vld [vmem:[%s3 + $0x80] sm:$0xff]
        %v546 = vld [vmem:[%s3 + $0x88] sm:$0xf]
        %v547 = vld [vmem:[%s3 + $0x8c] sm:$0xff]
        %v548 = vld [vmem:[%s3 + $0x94] sm:$0xff]
        %v549 = vld [vmem:[%s3 + $0x9c] sm:$0xff]
        %v550 = vld [vmem:[%s3 + $0xa4] sm:$0xf]
        %v551 = vld [vmem:[%s3 + $0xa8] sm:$0xff]
        %v552 = vld [vmem:[%s3 + $0xb0] sm:$0xff]
        %v553 = vld [vmem:[%s3 + $0xb8] sm:$0xff]
        %v554 = vld [vmem:[%s3 + $0xc0] sm:$0xf]
        %v555 = vld [vmem:[%s3 + $0xc4] sm:$0xff]
        %v556 = vld [vmem:[%s3 + $0xcc] sm:$0xff]
        %v557 = vld [vmem:[%s3 + $0xd4] sm:$0xff]
        %v558 = vld [vmem:[%s3 + $0xdc] sm:$0xf]
        %v559 = vld [vmem:[%s3 + $0xe0] sm:$0xff]
        %v560 = vld [vmem:[%s3 + $0xe8] sm:$0xff]
        %v561 = vld [vmem:[%s3 + $0xf0] sm:$0xff]
        %v562 = vld [vmem:[%s3 + $0xf8] sm:$0xf]
        %v563 = vld [vmem:[%s3 + $0xfc] sm:$0xff]
        %v564 = vld [vmem:[%s3 + $0x104] sm:$0xff]
        %v565 = vld [vmem:[%s3 + $0x10c] sm:$0xff]
        %v566 = vld [vmem:[%s3 + $0x114] sm:$0xf]
        %v567 = vld [vmem:[%s3 + $0x118] sm:$0xff]
        %v568 = vld [vmem:[%s3 + $0x120] sm:$0xff]
        %v569 = vld [vmem:[%s3 + $0x128] sm:$0xff]
        %v570 = vld [vmem:[%s3 + $0x130] sm:$0xf]
        %v571 = vld [vmem:[%s3 + $0x134] sm:$0xff]
        %v572 = vld [vmem:[%s3 + $0x13c] sm:$0xff]
        %v573 = vld [vmem:[%s3 + $0x144] sm:$0xff]
        %v574 = vld [vmem:[%s3 + $0x14c] sm:$0xf]
        %v575 = vld [vmem:[%s3 + $0x150] sm:$0xff]
        %v576 = vld [vmem:[%s3 + $0x158] sm:$0xff]
        %v577 = vld [vmem:[%s3 + $0x160] sm:$0xff]
        %v578 = vld [vmem:[%s3 + $0x168] sm:$0xf]
        %v579 = vld [vmem:[%s3 + $0x16c] sm:$0xff]
        %v580 = vld [vmem:[%s3 + $0x174] sm:$0xff]
        %v581 = vld [vmem:[%s3 + $0x17c] sm:$0xff]
        %v582 = vld [vmem:[%s3 + $0x184] sm:$0xf]
        %v583 = vld [vmem:[%s3 + $0x188] sm:$0xff]
        %v584 = vld [vmem:[%s3 + $0x190] sm:$0xff]
        %v585 = vld [vmem:[%s3 + $0x198] sm:$0xff]
        %v586 = vld [vmem:[%s3 + $0x1a0] sm:$0xf]
        %v587 = vld [vmem:[%s3 + $0x1a4] sm:$0xff]
        %v588 = vld [vmem:[%s3 + $0x1ac] sm:$0xff]
        %v589 = vld [vmem:[%s3 + $0x1b4] sm:$0xff]
        %v590 = vld [vmem:[%s3 + $0x1bc] sm:$0xf]
        %v591 = vld [vmem:[%s3 + $0x1c0] sm:$0xff]
        %v592 = vld [vmem:[%s3 + $0x1c8] sm:$0xff]
        %v593 = vld [vmem:[%s3 + $0x1d0] sm:$0xff]
        %v594 = vld [vmem:[%s3 + $0x1d8] sm:$0xf]
        %v595 = vld [vmem:[%s3 + $0x1dc] sm:$0xff]
        %v596 = vld [vmem:[%s3 + $0x1e4] sm:$0xff]
        %v597 = vld [vmem:[%s3 + $0x1ec] sm:$0xff]
        %v598 = vld [vmem:[%s3 + $0x1f4] sm:$0xf]
        %v599 = vld [vmem:[%s3 + $0x1f8] sm:$0xff]
        %v600 = vld [vmem:[%s3 + $0x200] sm:$0xff]
        %v601 = vld [vmem:[%s3 + $0x208] sm:$0xff]
        %v602 = vld [vmem:[%s3 + $0x210] sm:$0xf]
        %v603 = vld [vmem:[%s3 + $0x214] sm:$0xff]
        %v604 = vld [vmem:[%s3 + $0x21c] sm:$0xff]
        %v605 = vld [vmem:[%s3 + $0x224] sm:$0xff]
        %v606 = vld [vmem:[%s3 + $0x22c] sm:$0xf]
        %v607 = vld [vmem:[%s3 + $0x230] sm:$0xff]
        %v608 = vld [vmem:[%s3 + $0x238] sm:$0xff]
        %v609 = vld [vmem:[%s3 + $0x240] sm:$0xff]
        %v610 = vld [vmem:[%s3 + $0x248] sm:$0xf]
        %v611 = vld [vmem:[%s3 + $0x24c] sm:$0xff]
        %v612 = vld [vmem:[%s3 + $0x254] sm:$0xff]
        %v613 = vld [vmem:[%s3 + $0x25c] sm:$0xff]
        %v614 = vld [vmem:[%s3 + $0x264] sm:$0xf]
        %v615 = vld [vmem:[%s3 + $0x268] sm:$0xff]
        %v616 = vld [vmem:[%s3 + $0x270] sm:$0xff]
        %v617 = vld [vmem:[%s3 + $0x278] sm:$0xff]
        %v618 = vld [vmem:[%s3 + $0x280] sm:$0xf]
        %v619 = vld [vmem:[%s3 + $0x284] sm:$0xff]
        %v620 = vld [vmem:[%s3 + $0x28c] sm:$0xff]
        %v621 = vld [vmem:[%s3 + $0x294] sm:$0xff]
        %v622 = vld [vmem:[%s3 + $0x29c] sm:$0xf]
        %v623 = vld [vmem:[%s3 + $0x2a0] sm:$0xff]
        %v624 = vld [vmem:[%s3 + $0x2a8] sm:$0xff]
        %v625 = vld [vmem:[%s3 + $0x2b0] sm:$0xff]
        %v626 = vld [vmem:[%s3 + $0x2b8] sm:$0xf]
        %v627 = vld [vmem:[%s3 + $0x2bc] sm:$0xff]
        %v628 = vld [vmem:[%s3 + $0x2c4] sm:$0xff]
        %v629 = vld [vmem:[%s3 + $0x2cc] sm:$0xff]
        %v630 = vld [vmem:[%s3 + $0x2d4] sm:$0xf]
        %v631 = vld [vmem:[%s3 + $0x2d8] sm:$0xff]
        %v632 = vld [vmem:[%s3 + $0x2e0] sm:$0xff]
        %v633 = vld [vmem:[%s3 + $0x2e8] sm:$0xff]
        %v634 = vld [vmem:[%s3 + $0x2f0] sm:$0xf]
        %v635 = vld [vmem:[%s3 + $0x2f4] sm:$0xff]
        %v636 = vld [vmem:[%s3 + $0x2fc] sm:$0xff]
        %v637 = vld [vmem:[%s3 + $0x304] sm:$0xff]
        %v638 = vld [vmem:[%s3 + $0x30c] sm:$0xf]
        %v639 = vld [vmem:[%s3 + $0x310] sm:$0xff]
        %v640 = vld [vmem:[%s3 + $0x318] sm:$0xff]
        %v641 = vld [vmem:[%s3 + $0x320] sm:$0xff]
        %v642 = vld [vmem:[%s3 + $0x328] sm:$0xf]
        %v643 = vld [vmem:[%s3 + $0x32c] sm:$0xff]
        %v644 = vld [vmem:[%s3 + $0x334] sm:$0xff]
        %v645 = vld [vmem:[%s3 + $0x33c] sm:$0xff]
        %v646 = vld [vmem:[%s3 + $0x344] sm:$0xf]
        %v647 = vld [vmem:[%s3 + $0x348] sm:$0xff]
        %v648 = vld [vmem:[%s3 + $0x350] sm:$0xff]
        %v649 = vld [vmem:[%s3 + $0x358] sm:$0xff]
        %v650 = vld [vmem:[%s3 + $0x360] sm:$0xf]
        %v651 = vld [vmem:[%s3 + $0x364] sm:$0xff]
        %v652 = vld [vmem:[%s3 + $0x36c] sm:$0xff]
        %v653 = vld [vmem:[%s3 + $0x374] sm:$0xff]
        %v654 = vld [vmem:[%s3 + $0x37c] sm:$0xf]
        %v655 = vld [vmem:[%s4] sm:$0x7f]
        %v657 = vlaneseq
        %v658 = vshrl.u32 %v657, 7
        %v659 = vsub.s32 0, %v658
        %v660 = vrot.slane %v655, %v659
        %v661 = vlaneseq
        %v662 = vshrl.u32 %v661, 7
        %v663 = vsub.s32 1, %v662
        %v664 = vrot.slane %v655, %v663
        %v665 = vlaneseq
        %v666 = vshrl.u32 %v665, 7
        %v667 = vsub.s32 2, %v666
        %v668 = vrot.slane %v655, %v667
        %v669 = vlaneseq
        %v670 = vshrl.u32 %v669, 7
        %v671 = vsub.s32 3, %v670
        %v672 = vrot.slane %v655, %v671
        %v673 = vlaneseq
        %v674 = vshrl.u32 %v673, 7
        %v675 = vsub.s32 4, %v674
        %v676 = vrot.slane %v655, %v675
        %v677 = vlaneseq
        %v678 = vshrl.u32 %v677, 7
        %v679 = vsub.s32 5, %v678
        %v680 = vrot.slane %v655, %v679
        %v681 = vlaneseq
        %v682 = vshrl.u32 %v681, 7
        %v683 = vsub.s32 6, %v682
        %v684 = vrot.slane %v655, %v683
        %v820 = vunpack.c.l.b16 %v527
        %v821 = vunpack.c.h.b16 %v527
        %v822 = vunpack.c.l.b16 %v528
        %v823 = vunpack.c.h.b16 %v528
        %v824 = vunpack.c.l.b16 %v529
        %v825 = vunpack.c.h.b16 %v529
        %v826 = vunpack.c.l.b16 %v530
        %v827 = vunpack.c.l.b16 %v531
        %v828 = vunpack.c.h.b16 %v531
        %v829 = vunpack.c.l.b16 %v532
        %v830 = vunpack.c.h.b16 %v532
        %v831 = vunpack.c.l.b16 %v533
        %v832 = vunpack.c.h.b16 %v533
        %v833 = vunpack.c.l.b16 %v534
        %v834 = vunpack.c.l.b16 %v535
        %v835 = vunpack.c.h.b16 %v535
        %v836 = vunpack.c.l.b16 %v536
        %v837 = vunpack.c.h.b16 %v536
        %v838 = vunpack.c.l.b16 %v537
        %v839 = vunpack.c.h.b16 %v537
        %v840 = vunpack.c.l.b16 %v538
        %v841 = vunpack.c.l.b16 %v539
        %v842 = vunpack.c.h.b16 %v539
        %v843 = vunpack.c.l.b16 %v540
        %v844 = vunpack.c.h.b16 %v540
        %v845 = vunpack.c.l.b16 %v541
        %v846 = vunpack.c.h.b16 %v541
        %v847 = vunpack.c.l.b16 %v542
        %v848 = vunpack.c.l.b16 %v543
        %v849 = vunpack.c.h.b16 %v543
        %v850 = vunpack.c.l.b16 %v544
        %v851 = vunpack.c.h.b16 %v544
        %v852 = vunpack.c.l.b16 %v545
        %v853 = vunpack.c.h.b16 %v545
        %v854 = vunpack.c.l.b16 %v546
        %v855 = vunpack.c.l.b16 %v547
        %v856 = vunpack.c.h.b16 %v547
        %v857 = vunpack.c.l.b16 %v548
        %v858 = vunpack.c.h.b16 %v548
        %v859 = vunpack.c.l.b16 %v549
        %v860 = vunpack.c.h.b16 %v549
        %v861 = vunpack.c.l.b16 %v550
        %v862 = vunpack.c.l.b16 %v551
        %v863 = vunpack.c.h.b16 %v551
        %v864 = vunpack.c.l.b16 %v552
        %v865 = vunpack.c.h.b16 %v552
        %v866 = vunpack.c.l.b16 %v553
        %v867 = vunpack.c.h.b16 %v553
        %v868 = vunpack.c.l.b16 %v554
        %v869 = vunpack.c.l.b16 %v555
        %v870 = vunpack.c.h.b16 %v555
        %v871 = vunpack.c.l.b16 %v556
        %v872 = vunpack.c.h.b16 %v556
        %v873 = vunpack.c.l.b16 %v557
        %v874 = vunpack.c.h.b16 %v557
        %v875 = vunpack.c.l.b16 %v558
        %v876 = vunpack.c.l.b16 %v559
        %v877 = vunpack.c.h.b16 %v559
        %v878 = vunpack.c.l.b16 %v560
        %v879 = vunpack.c.h.b16 %v560
        %v880 = vunpack.c.l.b16 %v561
        %v881 = vunpack.c.h.b16 %v561
        %v882 = vunpack.c.l.b16 %v562
        %v883 = vunpack.c.l.b16 %v563
        %v884 = vunpack.c.h.b16 %v563
        %v885 = vunpack.c.l.b16 %v564
        %v886 = vunpack.c.h.b16 %v564
        %v887 = vunpack.c.l.b16 %v565
        %v888 = vunpack.c.h.b16 %v565
        %v889 = vunpack.c.l.b16 %v566
        %v890 = vunpack.c.l.b16 %v567
        %v891 = vunpack.c.h.b16 %v567
        %v892 = vunpack.c.l.b16 %v568
        %v893 = vunpack.c.h.b16 %v568
        %v894 = vunpack.c.l.b16 %v569
        %v895 = vunpack.c.h.b16 %v569
        %v896 = vunpack.c.l.b16 %v570
        %v897 = vunpack.c.l.b16 %v571
        %v898 = vunpack.c.h.b16 %v571
        %v899 = vunpack.c.l.b16 %v572
        %v900 = vunpack.c.h.b16 %v572
        %v901 = vunpack.c.l.b16 %v573
        %v902 = vunpack.c.h.b16 %v573
        %v903 = vunpack.c.l.b16 %v574
        %v904 = vunpack.c.l.b16 %v575
        %v905 = vunpack.c.h.b16 %v575
        %v906 = vunpack.c.l.b16 %v576
        %v907 = vunpack.c.h.b16 %v576
        %v908 = vunpack.c.l.b16 %v577
        %v909 = vunpack.c.h.b16 %v577
        %v910 = vunpack.c.l.b16 %v578
        %v911 = vunpack.c.l.b16 %v579
        %v912 = vunpack.c.h.b16 %v579
        %v913 = vunpack.c.l.b16 %v580
        %v914 = vunpack.c.h.b16 %v580
        %v915 = vunpack.c.l.b16 %v581
        %v916 = vunpack.c.h.b16 %v581
        %v917 = vunpack.c.l.b16 %v582
        %v918 = vunpack.c.l.b16 %v583
        %v919 = vunpack.c.h.b16 %v583
        %v920 = vunpack.c.l.b16 %v584
        %v921 = vunpack.c.h.b16 %v584
        %v922 = vunpack.c.l.b16 %v585
        %v923 = vunpack.c.h.b16 %v585
        %v924 = vunpack.c.l.b16 %v586
        %v925 = vunpack.c.l.b16 %v587
        %v926 = vunpack.c.h.b16 %v587
        %v927 = vunpack.c.l.b16 %v588
        %v928 = vunpack.c.h.b16 %v588
        %v929 = vunpack.c.l.b16 %v589
        %v930 = vunpack.c.h.b16 %v589
        %v931 = vunpack.c.l.b16 %v590
        %v932 = vunpack.c.l.b16 %v591
        %v933 = vunpack.c.h.b16 %v591
        %v934 = vunpack.c.l.b16 %v592
        %v935 = vunpack.c.h.b16 %v592
        %v936 = vunpack.c.l.b16 %v593
        %v937 = vunpack.c.h.b16 %v593
        %v938 = vunpack.c.l.b16 %v594
        %v939 = vunpack.c.l.b16 %v595
        %v940 = vunpack.c.h.b16 %v595
        %v941 = vunpack.c.l.b16 %v596
        %v942 = vunpack.c.h.b16 %v596
        %v943 = vunpack.c.l.b16 %v597
        %v944 = vunpack.c.h.b16 %v597
        %v945 = vunpack.c.l.b16 %v598
        %v946 = vunpack.c.l.b16 %v599
        %v947 = vunpack.c.h.b16 %v599
        %v948 = vunpack.c.l.b16 %v600
        %v949 = vunpack.c.h.b16 %v600
        %v950 = vunpack.c.l.b16 %v601
        %v951 = vunpack.c.h.b16 %v601
        %v952 = vunpack.c.l.b16 %v602
        %v953 = vunpack.c.l.b16 %v603
        %v954 = vunpack.c.h.b16 %v603
        %v955 = vunpack.c.l.b16 %v604
        %v956 = vunpack.c.h.b16 %v604
        %v957 = vunpack.c.l.b16 %v605
        %v958 = vunpack.c.h.b16 %v605
        %v959 = vunpack.c.l.b16 %v606
        %v960 = vunpack.c.l.b16 %v607
        %v961 = vunpack.c.h.b16 %v607
        %v962 = vunpack.c.l.b16 %v608
        %v963 = vunpack.c.h.b16 %v608
        %v964 = vunpack.c.l.b16 %v609
        %v965 = vunpack.c.h.b16 %v609
        %v966 = vunpack.c.l.b16 %v610
        %v967 = vunpack.c.l.b16 %v611
        %v968 = vunpack.c.h.b16 %v611
        %v969 = vunpack.c.l.b16 %v612
        %v970 = vunpack.c.h.b16 %v612
        %v971 = vunpack.c.l.b16 %v613
        %v972 = vunpack.c.h.b16 %v613
        %v973 = vunpack.c.l.b16 %v614
        %v974 = vunpack.c.l.b16 %v615
        %v975 = vunpack.c.h.b16 %v615
        %v976 = vunpack.c.l.b16 %v616
        %v977 = vunpack.c.h.b16 %v616
        %v978 = vunpack.c.l.b16 %v617
        %v979 = vunpack.c.h.b16 %v617
        %v980 = vunpack.c.l.b16 %v618
        %v981 = vunpack.c.l.b16 %v619
        %v982 = vunpack.c.h.b16 %v619
        %v983 = vunpack.c.l.b16 %v620
        %v984 = vunpack.c.h.b16 %v620
        %v985 = vunpack.c.l.b16 %v621
        %v986 = vunpack.c.h.b16 %v621
        %v987 = vunpack.c.l.b16 %v622
        %v988 = vunpack.c.l.b16 %v623
        %v989 = vunpack.c.h.b16 %v623
        %v990 = vunpack.c.l.b16 %v624
        %v991 = vunpack.c.h.b16 %v624
        %v992 = vunpack.c.l.b16 %v625
        %v993 = vunpack.c.h.b16 %v625
        %v994 = vunpack.c.l.b16 %v626
        %v995 = vunpack.c.l.b16 %v627
        %v996 = vunpack.c.h.b16 %v627
        %v997 = vunpack.c.l.b16 %v628
        %v998 = vunpack.c.h.b16 %v628
        %v999 = vunpack.c.l.b16 %v629
        %v1000 = vunpack.c.h.b16 %v629
        %v1001 = vunpack.c.l.b16 %v630
        %v1002 = vunpack.c.l.b16 %v631
        %v1003 = vunpack.c.h.b16 %v631
        %v1004 = vunpack.c.l.b16 %v632
        %v1005 = vunpack.c.h.b16 %v632
        %v1006 = vunpack.c.l.b16 %v633
        %v1007 = vunpack.c.h.b16 %v633
        %v1008 = vunpack.c.l.b16 %v634
        %v1009 = vunpack.c.l.b16 %v635
        %v1010 = vunpack.c.h.b16 %v635
        %v1011 = vunpack.c.l.b16 %v636
        %v1012 = vunpack.c.h.b16 %v636
        %v1013 = vunpack.c.l.b16 %v637
        %v1014 = vunpack.c.h.b16 %v637
        %v1015 = vunpack.c.l.b16 %v638
        %v1016 = vunpack.c.l.b16 %v639
        %v1017 = vunpack.c.h.b16 %v639
        %v1018 = vunpack.c.l.b16 %v640
        %v1019 = vunpack.c.h.b16 %v640
        %v1020 = vunpack.c.l.b16 %v641
        %v1021 = vunpack.c.h.b16 %v641
        %v1022 = vunpack.c.l.b16 %v642
        %v1023 = vunpack.c.l.b16 %v643
        %v1024 = vunpack.c.h.b16 %v643
        %v1025 = vunpack.c.l.b16 %v644
        %v1026 = vunpack.c.h.b16 %v644
        %v1027 = vunpack.c.l.b16 %v645
        %v1028 = vunpack.c.h.b16 %v645
        %v1029 = vunpack.c.l.b16 %v646
        %v1030 = vunpack.c.l.b16 %v647
        %v1031 = vunpack.c.h.b16 %v647
        %v1032 = vunpack.c.l.b16 %v648
        %v1033 = vunpack.c.h.b16 %v648
        %v1034 = vunpack.c.l.b16 %v649
        %v1035 = vunpack.c.h.b16 %v649
        %v1036 = vunpack.c.l.b16 %v650
        %v1037 = vunpack.c.l.b16 %v651
        %v1038 = vunpack.c.h.b16 %v651
        %v1039 = vunpack.c.l.b16 %v652
        %v1040 = vunpack.c.h.b16 %v652
        %v1041 = vunpack.c.l.b16 %v653
        %v1042 = vunpack.c.h.b16 %v653
        %v1043 = vunpack.c.l.b16 %v654
        %v1044 = vpack.c.b16 %v827, %v820
        %v1045 = vpack.c.b16 %v828, %v821
        %v1046 = vpack.c.b16 %v829, %v822
        %v1047 = vpack.c.b16 %v830, %v823
        %v1048 = vpack.c.b16 %v831, %v824
        %v1049 = vpack.c.b16 %v832, %v825
        %v1050 = vpack.c.b16 %v833, %v826
        %v1051 = vpack.c.b16 %v841, %v834
        %v1052 = vpack.c.b16 %v842, %v835
        %v1053 = vpack.c.b16 %v843, %v836
        %v1054 = vpack.c.b16 %v844, %v837
        %v1055 = vpack.c.b16 %v845, %v838
        %v1056 = vpack.c.b16 %v846, %v839
        %v1057 = vpack.c.b16 %v847, %v840
        %v1058 = vpack.c.b16 %v855, %v848
        %v1059 = vpack.c.b16 %v856, %v849
        %v1060 = vpack.c.b16 %v857, %v850
        %v1061 = vpack.c.b16 %v858, %v851
        %v1062 = vpack.c.b16 %v859, %v852
        %v1063 = vpack.c.b16 %v860, %v853
        %v1064 = vpack.c.b16 %v861, %v854
        %v1065 = vpack.c.b16 %v869, %v862
        %v1066 = vpack.c.b16 %v870, %v863
        %v1067 = vpack.c.b16 %v871, %v864
        %v1068 = vpack.c.b16 %v872, %v865
        %v1069 = vpack.c.b16 %v873, %v866
        %v1070 = vpack.c.b16 %v874, %v867
        %v1071 = vpack.c.b16 %v875, %v868
        %v1072 = vpack.c.b16 %v883, %v876
        %v1073 = vpack.c.b16 %v884, %v877
        %v1074 = vpack.c.b16 %v885, %v878
        %v1075 = vpack.c.b16 %v886, %v879
        %v1076 = vpack.c.b16 %v887, %v880
        %v1077 = vpack.c.b16 %v888, %v881
        %v1078 = vpack.c.b16 %v889, %v882
        %v1079 = vpack.c.b16 %v897, %v890
        %v1080 = vpack.c.b16 %v898, %v891
        %v1081 = vpack.c.b16 %v899, %v892
        %v1082 = vpack.c.b16 %v900, %v893
        %v1083 = vpack.c.b16 %v901, %v894
        %v1084 = vpack.c.b16 %v902, %v895
        %v1085 = vpack.c.b16 %v903, %v896
        %v1086 = vpack.c.b16 %v911, %v904
        %v1087 = vpack.c.b16 %v912, %v905
        %v1088 = vpack.c.b16 %v913, %v906
        %v1089 = vpack.c.b16 %v914, %v907
        %v1090 = vpack.c.b16 %v915, %v908
        %v1091 = vpack.c.b16 %v916, %v909
        %v1092 = vpack.c.b16 %v917, %v910
        %v1093 = vpack.c.b16 %v925, %v918
        %v1094 = vpack.c.b16 %v926, %v919
        %v1095 = vpack.c.b16 %v927, %v920
        %v1096 = vpack.c.b16 %v928, %v921
        %v1097 = vpack.c.b16 %v929, %v922
        %v1098 = vpack.c.b16 %v930, %v923
        %v1099 = vpack.c.b16 %v931, %v924
        %v1100 = vpack.c.b16 %v939, %v932
        %v1101 = vpack.c.b16 %v940, %v933
        %v1102 = vpack.c.b16 %v941, %v934
        %v1103 = vpack.c.b16 %v942, %v935
        %v1104 = vpack.c.b16 %v943, %v936
        %v1105 = vpack.c.b16 %v944, %v937
        %v1106 = vpack.c.b16 %v945, %v938
        %v1107 = vpack.c.b16 %v953, %v946
        %v1108 = vpack.c.b16 %v954, %v947
        %v1109 = vpack.c.b16 %v955, %v948
        %v1110 = vpack.c.b16 %v956, %v949
        %v1111 = vpack.c.b16 %v957, %v950
        %v1112 = vpack.c.b16 %v958, %v951
        %v1113 = vpack.c.b16 %v959, %v952
        %v1114 = vpack.c.b16 %v967, %v960
        %v1115 = vpack.c.b16 %v968, %v961
        %v1116 = vpack.c.b16 %v969, %v962
        %v1117 = vpack.c.b16 %v970, %v963
        %v1118 = vpack.c.b16 %v971, %v964
        %v1119 = vpack.c.b16 %v972, %v965
        %v1120 = vpack.c.b16 %v973, %v966
        %v1121 = vpack.c.b16 %v981, %v974
        %v1122 = vpack.c.b16 %v982, %v975
        %v1123 = vpack.c.b16 %v983, %v976
        %v1124 = vpack.c.b16 %v984, %v977
        %v1125 = vpack.c.b16 %v985, %v978
        %v1126 = vpack.c.b16 %v986, %v979
        %v1127 = vpack.c.b16 %v987, %v980
        %v1128 = vpack.c.b16 %v995, %v988
        %v1129 = vpack.c.b16 %v996, %v989
        %v1130 = vpack.c.b16 %v997, %v990
        %v1131 = vpack.c.b16 %v998, %v991
        %v1132 = vpack.c.b16 %v999, %v992
        %v1133 = vpack.c.b16 %v1000, %v993
        %v1134 = vpack.c.b16 %v1001, %v994
        %v1135 = vpack.c.b16 %v1009, %v1002
        %v1136 = vpack.c.b16 %v1010, %v1003
        %v1137 = vpack.c.b16 %v1011, %v1004
        %v1138 = vpack.c.b16 %v1012, %v1005
        %v1139 = vpack.c.b16 %v1013, %v1006
        %v1140 = vpack.c.b16 %v1014, %v1007
        %v1141 = vpack.c.b16 %v1015, %v1008
        %v1142 = vpack.c.b16 %v1023, %v1016
        %v1143 = vpack.c.b16 %v1024, %v1017
        %v1144 = vpack.c.b16 %v1025, %v1018
        %v1145 = vpack.c.b16 %v1026, %v1019
        %v1146 = vpack.c.b16 %v1027, %v1020
        %v1147 = vpack.c.b16 %v1028, %v1021
        %v1148 = vpack.c.b16 %v1029, %v1022
        %v1149 = vpack.c.b16 %v1037, %v1030
        %v1150 = vpack.c.b16 %v1038, %v1031
        %v1151 = vpack.c.b16 %v1039, %v1032
        %v1152 = vpack.c.b16 %v1040, %v1033
        %v1153 = vpack.c.b16 %v1041, %v1034
        %v1154 = vpack.c.b16 %v1042, %v1035
        %v1155 = vpack.c.b16 %v1043, %v1036
        %1268 = vmatprep.subr.bf16.mxu0 %v1094
        %1269 = vmatpush1.bf16.msra.mxu0 %v1093
        %1270 = vmatprep.subr.bf16.mxu0 %v1087
        %1271 = vmatpush1.bf16.msra.mxu0 %v1086
        %1272 = vmatprep.subr.bf16.mxu0 %v1080
        %1273 = vmatpush1.bf16.msra.mxu0 %v1079
        %1274 = vmatprep.subr.bf16.mxu0 %v1073
        %1275 = vmatpush1.bf16.msra.mxu0 %v1072
        %1276 = vmatprep.subr.bf16.mxu0 %v1066
        %1277 = vmatpush1.bf16.msra.mxu0 %v1065
        %1278 = vmatprep.subr.bf16.mxu0 %v1059
        %1279 = vmatpush1.bf16.msra.mxu0 %v1058
        %1280 = vmatprep.subr.bf16.mxu0 %v1052
        %1281 = vmatpush1.bf16.msra.mxu0 %v1051
        %1282 = vmatprep.subr.bf16.mxu0 %v1045
        %1283 = vmatpush1.bf16.msra.mxu0 %v1044
        %1284 = vmatprep.subr.bf16.mxu0 %v1150
        %1285 = vmatpush2.bf16.msra.mxu0 %v1149
        %1286 = vmatprep.subr.bf16.mxu0 %v1143
        %1287 = vmatpush2.bf16.msra.mxu0 %v1142
        %1288 = vmatprep.subr.bf16.mxu0 %v1136
        %1289 = vmatpush2.bf16.msra.mxu0 %v1135
        %1290 = vmatprep.subr.bf16.mxu0 %v1129
        %1291 = vmatpush2.bf16.msra.mxu0 %v1128
        %1292 = vmatprep.subr.bf16.mxu0 %v1122
        %1293 = vmatpush2.bf16.msra.mxu0 %v1121
        %1294 = vmatprep.subr.bf16.mxu0 %v1115
        %1295 = vmatpush2.bf16.msra.mxu0 %v1114
        %1296 = vmatprep.subr.bf16.mxu0 %v1108
        %1297 = vmatpush2.bf16.msra.mxu0 %v1107
        %1298 = vmatprep.subr.bf16.mxu0 %v1101
        %1299 = vmatpush2.bf16.msra.mxu0 %v1100
        %1300 = vmatprep.mubr.bf16.mxu0 %v524
        %1301 = vmatmul.mubr.bf16.gmra.mxu0 %v523
        %v1302 = vpop.f32.mrf.mxu0
        %v1303 = vadd.f32 %v660, %v1302
        %v1304 = vpop.f32.mrf.mxu0
        %v1305 = vadd.f32 %v664, %v1304
        %v1306 = vpop.f32.mrf.mxu0
        %v1307 = vadd.f32 %v660, %v1306
        %v1308 = vpop.f32.mrf.mxu0
        %v1309 = vadd.f32 %v664, %v1308
        %1310 = vmatprep.mubr.bf16.mxu0 %v526
        %1311 = vmatmul.mubr.bf16.gmra.mxu0 %v525
        %v1312 = vpop.f32.mrf.mxu0
        %v1313 = vadd.f32 %v660, %v1312
        %v1314 = vpop.f32.mrf.mxu0
        %v1315 = vadd.f32 %v664, %v1314
        %v1316 = vpop.f32.mrf.mxu0
        %v1317 = vadd.f32 %v660, %v1316
        %v1318 = vpop.f32.mrf.mxu0
        %v1319 = vadd.f32 %v664, %v1318
        %1320 = vdwg.mxu0
        %1321 = vmatprep.subr.bf16.mxu0 %v1096
        %1322 = vmatpush1.bf16.msra.mxu0 %v1095
        %1323 = vmatprep.subr.bf16.mxu0 %v1089
        %1324 = vmatpush1.bf16.msra.mxu0 %v1088
        %1325 = vmatprep.subr.bf16.mxu0 %v1082
        %1326 = vmatpush1.bf16.msra.mxu0 %v1081
        %1327 = vmatprep.subr.bf16.mxu0 %v1075
        %1328 = vmatpush1.bf16.msra.mxu0 %v1074
        %1329 = vmatprep.subr.bf16.mxu0 %v1068
        %1330 = vmatpush1.bf16.msra.mxu0 %v1067
        %1331 = vmatprep.subr.bf16.mxu0 %v1061
        %1332 = vmatpush1.bf16.msra.mxu0 %v1060
        %1333 = vmatprep.subr.bf16.mxu0 %v1054
        %1334 = vmatpush1.bf16.msra.mxu0 %v1053
        %1335 = vmatprep.subr.bf16.mxu0 %v1047
        %1336 = vmatpush1.bf16.msra.mxu0 %v1046
        %1337 = vmatprep.subr.bf16.mxu0 %v1152
        %1338 = vmatpush2.bf16.msra.mxu0 %v1151
        %1339 = vmatprep.subr.bf16.mxu0 %v1145
        %1340 = vmatpush2.bf16.msra.mxu0 %v1144
        %1341 = vmatprep.subr.bf16.mxu0 %v1138
        %1342 = vmatpush2.bf16.msra.mxu0 %v1137
        %1343 = vmatprep.subr.bf16.mxu0 %v1131
        %1344 = vmatpush2.bf16.msra.mxu0 %v1130
        %1345 = vmatprep.subr.bf16.mxu0 %v1124
        %1346 = vmatpush2.bf16.msra.mxu0 %v1123
        %1347 = vmatprep.subr.bf16.mxu0 %v1117
        %1348 = vmatpush2.bf16.msra.mxu0 %v1116
        %1349 = vmatprep.subr.bf16.mxu0 %v1110
        %1350 = vmatpush2.bf16.msra.mxu0 %v1109
        %1351 = vmatprep.subr.bf16.mxu0 %v1103
        %1352 = vmatpush2.bf16.msra.mxu0 %v1102
        %1353 = vmatprep.mubr.bf16.mxu0 %v524
        %1354 = vmatmul.mubr.bf16.gmra.mxu0 %v523
        %v1355 = vpop.f32.mrf.mxu0
        %v1356 = vadd.f32 %v668, %v1355
        %v1357 = vpop.f32.mrf.mxu0
        %v1358 = vadd.f32 %v672, %v1357
        %v1359 = vpop.f32.mrf.mxu0
        %v1360 = vadd.f32 %v668, %v1359
        %v1361 = vpop.f32.mrf.mxu0
        %v1362 = vadd.f32 %v672, %v1361
        %1363 = vmatprep.mubr.bf16.mxu0 %v526
        %1364 = vmatmul.mubr.bf16.gmra.mxu0 %v525
        %v1365 = vpop.f32.mrf.mxu0
        %v1366 = vadd.f32 %v668, %v1365
        %v1367 = vpop.f32.mrf.mxu0
        %v1368 = vadd.f32 %v672, %v1367
        %v1369 = vpop.f32.mrf.mxu0
        %v1370 = vadd.f32 %v668, %v1369
        %v1371 = vpop.f32.mrf.mxu0
        %v1372 = vadd.f32 %v672, %v1371
        %1373 = vdwg.mxu0
        %1374 = vmatprep.subr.bf16.mxu0 %v1098
        %1375 = vmatpush1.bf16.msra.mxu0 %v1097
        %1376 = vmatprep.subr.bf16.mxu0 %v1091
        %1377 = vmatpush1.bf16.msra.mxu0 %v1090
        %1378 = vmatprep.subr.bf16.mxu0 %v1084
        %1379 = vmatpush1.bf16.msra.mxu0 %v1083
        %1380 = vmatprep.subr.bf16.mxu0 %v1077
        %1381 = vmatpush1.bf16.msra.mxu0 %v1076
        %1382 = vmatprep.subr.bf16.mxu0 %v1070
        %1383 = vmatpush1.bf16.msra.mxu0 %v1069
        %1384 = vmatprep.subr.bf16.mxu0 %v1063
        %1385 = vmatpush1.bf16.msra.mxu0 %v1062
        %1386 = vmatprep.subr.bf16.mxu0 %v1056
        %1387 = vmatpush1.bf16.msra.mxu0 %v1055
        %1388 = vmatprep.subr.bf16.mxu0 %v1049
        %1389 = vmatpush1.bf16.msra.mxu0 %v1048
        %1390 = vmatprep.subr.bf16.mxu0 %v1154
        %1391 = vmatpush2.bf16.msra.mxu0 %v1153
        %1392 = vmatprep.subr.bf16.mxu0 %v1147
        %1393 = vmatpush2.bf16.msra.mxu0 %v1146
        %1394 = vmatprep.subr.bf16.mxu0 %v1140
        %1395 = vmatpush2.bf16.msra.mxu0 %v1139
        %1396 = vmatprep.subr.bf16.mxu0 %v1133
        %1397 = vmatpush2.bf16.msra.mxu0 %v1132
        %1398 = vmatprep.subr.bf16.mxu0 %v1126
        %1399 = vmatpush2.bf16.msra.mxu0 %v1125
        %1400 = vmatprep.subr.bf16.mxu0 %v1119
        %1401 = vmatpush2.bf16.msra.mxu0 %v1118
        %1402 = vmatprep.subr.bf16.mxu0 %v1112
        %1403 = vmatpush2.bf16.msra.mxu0 %v1111
        %1404 = vmatprep.subr.bf16.mxu0 %v1105
        %1405 = vmatpush2.bf16.msra.mxu0 %v1104
        %1406 = vmatprep.mubr.bf16.mxu0 %v524
        %1407 = vmatmul.mubr.bf16.gmra.mxu0 %v523
        %v1408 = vpop.f32.mrf.mxu0
        %v1409 = vadd.f32 %v676, %v1408
        %v1410 = vpop.f32.mrf.mxu0
        %v1411 = vadd.f32 %v680, %v1410
        %v1412 = vpop.f32.mrf.mxu0
        %v1413 = vadd.f32 %v676, %v1412
        %v1414 = vpop.f32.mrf.mxu0
        %v1415 = vadd.f32 %v680, %v1414
        %1416 = vmatprep.mubr.bf16.mxu0 %v526
        %1417 = vmatmul.mubr.bf16.gmra.mxu0 %v525
        %v1418 = vpop.f32.mrf.mxu0
        %v1419 = vadd.f32 %v676, %v1418
        %v1420 = vpop.f32.mrf.mxu0
        %v1421 = vadd.f32 %v680, %v1420
        %v1422 = vpop.f32.mrf.mxu0
        %v1423 = vadd.f32 %v676, %v1422
        %v1424 = vpop.f32.mrf.mxu0
        %v1425 = vadd.f32 %v680, %v1424
        %1426 = vdwg.mxu0
        %1427 = vmatprep.subr.bf16.mxu0 0
        %1428 = vmatpush1.bf16.msra.mxu0 %v1099
        %1429 = vmatprep.subr.bf16.mxu0 0
        %1430 = vmatpush1.bf16.msra.mxu0 %v1092
        %1431 = vmatprep.subr.bf16.mxu0 0
        %1432 = vmatpush1.bf16.msra.mxu0 %v1085
        %1433 = vmatprep.subr.bf16.mxu0 0
        %1434 = vmatpush1.bf16.msra.mxu0 %v1078
        %1435 = vmatprep.subr.bf16.mxu0 0
        %1436 = vmatpush1.bf16.msra.mxu0 %v1071
        %1437 = vmatprep.subr.bf16.mxu0 0
        %1438 = vmatpush1.bf16.msra.mxu0 %v1064
        %1439 = vmatprep.subr.bf16.mxu0 0
        %1440 = vmatpush1.bf16.msra.mxu0 %v1057
        %1441 = vmatprep.subr.bf16.mxu0 0
        %1442 = vmatpush1.bf16.msra.mxu0 %v1050
        %1443 = vmatprep.subr.bf16.mxu0 0
        %1444 = vmatpush2.bf16.msra.mxu0 %v1155
        %1445 = vmatprep.subr.bf16.mxu0 0
        %1446 = vmatpush2.bf16.msra.mxu0 %v1148
        %1447 = vmatprep.subr.bf16.mxu0 0
        %1448 = vmatpush2.bf16.msra.mxu0 %v1141
        %1449 = vmatprep.subr.bf16.mxu0 0
        %1450 = vmatpush2.bf16.msra.mxu0 %v1134
        %1451 = vmatprep.subr.bf16.mxu0 0
        %1452 = vmatpush2.bf16.msra.mxu0 %v1127
        %1453 = vmatprep.subr.bf16.mxu0 0
        %1454 = vmatpush2.bf16.msra.mxu0 %v1120
        %1455 = vmatprep.subr.bf16.mxu0 0
        %1456 = vmatpush2.bf16.msra.mxu0 %v1113
        %1457 = vmatprep.subr.bf16.mxu0 0
        %1458 = vmatpush2.bf16.msra.mxu0 %v1106
        %1459 = vmatprep.mubr.bf16.mxu0 %v524
        %1460 = vmatmul.mubr.bf16.gmra.mxu0 %v523
        %v1461 = vpop.f32.mrf.mxu0
        %v1462 = vadd.f32 %v684, %v1461
        %v1463 = vpop.f32.mrf.mxu0
        %v1464 = vpop.f32.mrf.mxu0
        %v1465 = vadd.f32 %v684, %v1464
        %v1466 = vpop.f32.mrf.mxu0
        %1467 = vmatprep.mubr.bf16.mxu0 %v526
        %1468 = vmatmul.mubr.bf16.gmra.mxu0 %v525
        %v1469 = vpop.f32.mrf.mxu0
        %v1470 = vadd.f32 %v684, %v1469
        %v1471 = vpop.f32.mrf.mxu0
        %v1472 = vpop.f32.mrf.mxu0
        %v1473 = vadd.f32 %v684, %v1472
        %v1474 = vpop.f32.mrf.mxu0
        %1475 = vdwg.mxu0
        %v1476 = vtanh.pop %v1303
        %v1477 = vtanh.pop %v1305
        %v1478 = vtanh.pop %v1356
        %v1479 = vtanh.pop %v1358
        %v1480 = vtanh.pop %v1409
        %v1481 = vtanh.pop %v1411
        %v1482 = vtanh.pop %v1462
        %v1483 = vtanh.pop %v1307
        %v1484 = vtanh.pop %v1309
        %v1485 = vtanh.pop %v1360
        %v1486 = vtanh.pop %v1362
        %v1487 = vtanh.pop %v1413
        %v1488 = vtanh.pop %v1415
        %v1489 = vtanh.pop %v1465
        %v1490 = vtanh.pop %v1313
        %v1491 = vtanh.pop %v1315
        %v1492 = vtanh.pop %v1366
        %v1493 = vtanh.pop %v1368
        %v1494 = vtanh.pop %v1419
        %v1495 = vtanh.pop %v1421
        %v1496 = vtanh.pop %v1470
        %v1497 = vtanh.pop %v1317
        %v1498 = vtanh.pop %v1319
        %v1499 = vtanh.pop %v1370
        %v1500 = vtanh.pop %v1372
        %v1501 = vtanh.pop %v1423
        %v1502 = vtanh.pop %v1425
        %v1503 = vtanh.pop %v1473
        %v1504 = vpack.c.bf16 %v1483, %v1476
        %v1505 = vpack.c.bf16 %v1484, %v1477
        %v1506 = vpack.c.bf16 %v1485, %v1478
        %v1507 = vpack.c.bf16 %v1486, %v1479
        %v1508 = vpack.c.bf16 %v1487, %v1480
        %v1509 = vpack.c.bf16 %v1488, %v1481
        %v1510 = vpack.c.bf16 %v1489, %v1482
        %v1511 = vpack.c.bf16 %v1497, %v1490
        %v1512 = vpack.c.bf16 %v1498, %v1491
        %v1513 = vpack.c.bf16 %v1499, %v1492
        %v1514 = vpack.c.bf16 %v1500, %v1493
        %v1515 = vpack.c.bf16 %v1501, %v1494
        %v1516 = vpack.c.bf16 %v1502, %v1495
        %v1517 = vpack.c.bf16 %v1503, %v1496
        %v1532 = vunpack.c.l.b16 %v1504
        %v1533 = vunpack.c.l.b16 %v1505
        %v1534 = vunpack.c.l.b16 %v1506
        %v1535 = vunpack.c.l.b16 %v1507
        %v1536 = vunpack.c.l.b16 %v1508
        %v1537 = vunpack.c.l.b16 %v1509
        %v1538 = vunpack.c.l.b16 %v1510
        %v1539 = vunpack.c.h.b16 %v1504
        %v1540 = vunpack.c.h.b16 %v1505
        %v1541 = vunpack.c.h.b16 %v1506
        %v1542 = vunpack.c.h.b16 %v1507
        %v1543 = vunpack.c.h.b16 %v1508
        %v1544 = vunpack.c.h.b16 %v1509
        %v1545 = vunpack.c.h.b16 %v1510
        %v1546 = vunpack.c.l.b16 %v1511
        %v1547 = vunpack.c.l.b16 %v1512
        %v1548 = vunpack.c.l.b16 %v1513
        %v1549 = vunpack.c.l.b16 %v1514
        %v1550 = vunpack.c.l.b16 %v1515
        %v1551 = vunpack.c.l.b16 %v1516
        %v1552 = vunpack.c.l.b16 %v1517
        %v1553 = vunpack.c.h.b16 %v1511
        %v1554 = vunpack.c.h.b16 %v1512
        %v1555 = vunpack.c.h.b16 %v1513
        %v1556 = vunpack.c.h.b16 %v1514
        %v1557 = vunpack.c.h.b16 %v1515
        %v1558 = vunpack.c.h.b16 %v1516
        %v1559 = vunpack.c.h.b16 %v1517
        %v1560 = vpack.c.b16 %v1533, %v1532
        %v1561 = vpack.c.b16 %v1535, %v1534
        %v1562 = vpack.c.b16 %v1537, %v1536
        %v1563 = vpack.c.b16 %v1538, %v1538
        %v1564 = vpack.c.b16 %v1540, %v1539
        %v1565 = vpack.c.b16 %v1542, %v1541
        %v1566 = vpack.c.b16 %v1544, %v1543
        %v1567 = vpack.c.b16 %v1545, %v1545
        %v1568 = vpack.c.b16 %v1547, %v1546
        %v1569 = vpack.c.b16 %v1549, %v1548
        %v1570 = vpack.c.b16 %v1551, %v1550
        %v1571 = vpack.c.b16 %v1552, %v1552
        %v1572 = vpack.c.b16 %v1554, %v1553
        %v1573 = vpack.c.b16 %v1556, %v1555
        %v1574 = vpack.c.b16 %v1558, %v1557
        %v1575 = vpack.c.b16 %v1559, %v1559
        %1592 = vst [vmem:[%s220] sm:$0xff] %v1560
        %1593 = vst [vmem:[%s220 + $0x8] sm:$0xff] %v1561
        %1594 = vst [vmem:[%s220 + $0x10] sm:$0xff] %v1562
        %vm1595 = vcmask 125952
        %1596 = vst.msk [vmem:[%s220 + $0x18] sm:$0xf] %vm1595, %v1563
        %1597 = vst [vmem:[%s220 + $0x1c] sm:$0xff] %v1564
        %1598 = vst [vmem:[%s220 + $0x24] sm:$0xff] %v1565
        %1599 = vst [vmem:[%s220 + $0x2c] sm:$0xff] %v1566
        %1600 = vst.msk [vmem:[%s220 + $0x34] sm:$0xf] %vm1595, %v1567
        %1601 = vst [vmem:[%s220 + $0x38] sm:$0xff] %v1568
        %1602 = vst [vmem:[%s220 + $0x40] sm:$0xff] %v1569
        %1603 = vst [vmem:[%s220 + $0x48] sm:$0xff] %v1570
        %1604 = vst.msk [vmem:[%s220 + $0x50] sm:$0xf] %vm1595, %v1571
        %1605 = vst [vmem:[%s220 + $0x54] sm:$0xff] %v1572
        %1606 = vst [vmem:[%s220 + $0x5c] sm:$0xff] %v1573
        %1607 = vst [vmem:[%s220 + $0x64] sm:$0xff] %v1574
        %1608 = vst.msk [vmem:[%s220 + $0x6c] sm:$0xf] %vm1595, %v1575
        %s1609 = sand.u32 %s137, 1
        %s1610 = scalar_lea.sflag [#allocation3], %s1609
        %s1611 = sand.u32 %s137, 1
        %s1612 = smul.addr %s1611, 112
        %s1613 = scalar_lea.vmem [#allocation2], %s1612
        // Predicated region
        $region41: #{_generator_forward_padded.1} parent=39 // pred_check
          %p1614 = pneg %p147
        $region42: #{_generator_forward_padded.1} parent=39 // pred_check_branch
          %1616 = sbr.rel (%p1614) target = $region44
        $region43: #{_generator_forward_padded.1} parent=39 // pred_region
          %s1617 = smul.u32 4, %s19
          %s1619 = ssub.s32 1792, 1792
          %1620 = vsyncadd %s1610, %s1619
          %s1621 = smul.addr %s1617, 7
          %s1622 = smul.addr %s1621, 64
          %s1623 = scalar_lea.hbm %s5, %s1622
          %s1624 = sshll.u32 %s1613, 4
          %s1625 = int_to_ptr.vmem [resolvable:$true] %s1624
          %1630 = dma.vmem_to_hbm [thread:$0]  %s1625, 1792, %s1623, %s1610, 448, 448, 28
        $region44: #{_generator_forward_padded.1} parent=39 // pred_fallthru
          _
      $region40: #{_generator_forward_padded.1} parent=5 // pred_fallthru
        _
      %p1631 = scmp.le.s32.totalorder 2, %s14
      // Predicated region
      $region45: #{_generator_forward_padded.1} parent=5 // pred_check
        %p1632 = pneg %p1631
      $region46: #{_generator_forward_padded.1} parent=5 // pred_check_branch
        %1634 = sbr.rel (%p1632) target = $region48
      $region47: #{_generator_forward_padded.1} parent=5 // pred_region
        %s1635 = ssub.s32 %s14, 2
        // Predicated region
        $region49: #{_generator_forward_padded.1} parent=47 // pred_check
          %p1636 = pneg %p153
        $region50: #{_generator_forward_padded.1} parent=47 // pred_check_branch
          %1638 = sbr.rel (%p1636) target = $region52
        $region51: #{_generator_forward_padded.1} parent=47 // pred_region
          %s1639 = sand.u32 %s138, 1
          %s1640 = scalar_lea.sflag [#allocation3], %s1639
          %s1641 = sand.u32 %s138, 1
          %s1642 = smul.addr %s1641, 112
          %s1643 = scalar_lea.vmem [#allocation2], %s1642
          %1644 = dma.done %s1640, 1792
        $region52: #{_generator_forward_padded.1} parent=47 // pred_fallthru
          _
      $region48: #{_generator_forward_padded.1} parent=5 // pred_fallthru
        _
    $region6: #{_generator_forward_padded.1} parent=1 // loop_footer
      %s18 = sadd.s32 1, %s14
    $region7: #{_generator_forward_padded.1} parent=1 // loop_footer_branch
      %13 = sbr.rel target = $region3
    $region8: #{_generator_forward_padded.1} parent=1 // loop_exit
      _
    %1645 = vsyncpa [#allocation3], 1
    %s1646 = scalar_lea.sflag [#allocation3], 1
    %1647 = vsyncpa %s1646, 1

</llo_original>
